<compile_context>
chip_gen: v6e
topology: v6e:2x2x1
jax: 0.10.0
libtpu: 0.0.40
codegen_flags: <defaults>
</compile_context>

<pallas_src>
import math
import jax
import jax.numpy as jnp
from jax.experimental import pallas as pl
from jax.experimental.pallas import tpu as pltpu


def _round_up(a: int, b: int) -> int:
    return ((a + b - 1) // b) * b


def _cdiv(a: int, b: int) -> int:
    return (a + b - 1) // b


def _sublane_granularity(dtype) -> int:
    # f32 -> 8, bf16/f16 -> 16, int8/fp8 -> 32 sublanes per vreg tile.
    return {4: 8, 2: 16, 1: 32}.get(jnp.dtype(dtype).itemsize, 8)


def _balanced_tile(dim: int, tile_max: int, align: int) -> int:
    """Largest tile <= tile_max (multiple of `align`) that splits `dim` into
    near-equal blocks, keeping last-block padding small instead of padding a
    full extra block."""
    if dim <= tile_max:
        return _round_up(dim, align)
    n_blocks = _cdiv(dim, tile_max)
    return _round_up(_cdiv(dim, n_blocks), align)


def _linear_bias_kernel(x_ref, w_ref, b_ref, o_ref, acc_ref):
    k = pl.program_id(2)

    @pl.when(k == 0)
    def _init():
        # Seed the f32 accumulator with the broadcast bias: removes the extra
        # (tm, tn) VPU add in the finalize step (finalize = cast + store only).
        acc_ref[...] = jnp.broadcast_to(b_ref[...], acc_ref.shape)

    acc_ref[...] += jnp.dot(
        x_ref[...], w_ref[...], preferred_element_type=jnp.float32
    )

    @pl.when(k == pl.num_programs(2) - 1)
    def _finalize():
        o_ref[...] = acc_ref[...].astype(o_ref.dtype)


def _linear_nobias_kernel(x_ref, w_ref, o_ref, acc_ref):
    k = pl.program_id(2)

    @pl.when(k == 0)
    def _init():
        acc_ref[...] = jnp.zeros_like(acc_ref)

    acc_ref[...] += jnp.dot(
        x_ref[...], w_ref[...], preferred_element_type=jnp.float32
    )

    @pl.when(k == pl.num_programs(2) - 1)
    def _finalize():
        o_ref[...] = acc_ref[...].astype(o_ref.dtype)


def custom_linear(x, weight, bias=None, *, tm=512, tn=512, tk=1024,
                  compute_dtype=None, min_flops_for_pallas=2_000_000):
    """y = x @ weight.T + bias via a tiled Pallas TPU kernel.

    x: (M, K); weight: (N, K) (torch layout); bias: (N,) or None.

    Design:
      * Weight is transposed once to (K, N) in the wrapper, so the kernel does the
        canonical A @ B contraction (no per-tile XLU transpose stealing the MXU's
        vector-extended slot).
      * (i, j, k) grid over (M, N, K); K innermost and "arbitrary" with a resident
        f32 VMEM accumulator; M/N are "parallel" (megacore sharding).
      * Large default tiles (512, 512, 1024) cut redundant HBM re-streaming; with
        f32 + double buffering that is ~11 MiB, and vmem_limit_bytes is raised
        explicitly so the same config also fits v5e's smaller default scoped VMEM.
      * Tiles are balanced against the problem size (not just clamped), so ragged
        shapes pad by <~1 block-fraction instead of up to a whole block.
      * Bias seeds the accumulator at k==0 (no finalize add).
      * Optional compute_dtype=jnp.bfloat16 casts the MXU inputs (f32 accumulation
        kept) for the big MXU/bandwidth win when numerics allow; default None keeps
        exact f32 semantics of the reference module.
      * Tiny problems dispatch to plain jnp.dot (pallas_call overhead dominates).
    """
    M, K = x.shape
    N, K2 = weight.shape
    assert K == K2, "weight must be (out_features, in_features)"

    if 2 * M * N * K < min_flops_for_pallas:
        # TODO(synk): the torch module always calls its custom C++ matmul; here tiny
        # shapes go to XLA's GEMM which is strictly faster than a 1-tile pallas_call.
        y = jnp.dot(x, weight.T, preferred_element_type=jnp.float32).astype(x.dtype)
        if bias is not None:
            y = y + bias.astype(y.dtype)
        return y

    out_dtype = x.dtype
    cdt = jnp.dtype(compute_dtype) if compute_dtype is not None else jnp.dtype(x.dtype)

    # Tile sizing: lane dims (N, K) multiples of 128; sublane dim (M) by dtype.
    sub = max(_sublane_granularity(out_dtype), _sublane_granularity(cdt))
    tm = _balanced_tile(M, max(tm, sub), sub)
    tn = _balanced_tile(N, max(tn, 128), 128)
    tk = _balanced_tile(K, max(tk, 128), 128)

    M_pad = _round_up(M, tm)
    N_pad = _round_up(N, tn)
    K_pad = _round_up(K, tk)

    # One-time (K, N) weight layout; transpose + pad + cast fuse into one HBM copy.
    w_t = weight.T
    if (K_pad, N_pad) != (K, N):
        w_t = jnp.pad(w_t, ((0, K_pad - K), (0, N_pad - N)))
    x_p = x
    if (M_pad, K_pad) != (M, K):
        x_p = jnp.pad(x, ((0, M_pad - M), (0, K_pad - K)))
    if cdt != jnp.dtype(x.dtype):
        x_p = x_p.astype(cdt)
    if cdt != jnp.dtype(weight.dtype):
        w_t = w_t.astype(cdt)

    gm, gn, gk = M_pad // tm, N_pad // tn, K_pad // tk
    grid = (gm, gn, gk)

    x_spec = pl.BlockSpec((tm, tk), lambda i, j, k: (i, k))
    w_spec = pl.BlockSpec((tk, tn), lambda i, j, k: (k, j))   # (K, N): canonical MXU feed
    o_spec = pl.BlockSpec((tm, tn), lambda i, j, k: (i, j))

    in_item = cdt.itemsize
    out_item = jnp.dtype(out_dtype).itemsize

    # bytes_accessed accounts for the re-streaming factor (x re-read per N-block,
    # weight re-read per M-block), not just one pass per operand.
    cost = pl.CostEstimate(
        flops=2 * M_pad * N_pad * K_pad,
        transcendentals=0,
        bytes_accessed=(gn * M_pad * K_pad + gm * N_pad * K_pad) * in_item
        + M_pad * N_pad * out_item,
    )

    block_bytes = (
        2 * (tm * tk + tk * tn) * in_item   # double-buffered x / w tiles
        + 2 * tm * tn * out_item            # double-buffered output tile
        + tm * tn * 4                       # f32 accumulator scratch
        + 2 * tn * 4                        # bias tile (f32)
    )
    vmem_limit = min(max(int(block_bytes * 1.5), 32 * 1024 * 1024), 64 * 1024 * 1024)

    cparams = pltpu.CompilerParams(
        dimension_semantics=("parallel", "parallel", "arbitrary"),
        vmem_limit_bytes=vmem_limit,
    )
    out_shape = jax.ShapeDtypeStruct((M_pad, N_pad), out_dtype)
    scratch = [pltpu.VMEM((tm, tn), jnp.float32)]

    if bias is not None:
        # Bias kept in f32 so the accumulator seed is exact regardless of compute dtype.
        b_p = bias.astype(jnp.float32)
        if N_pad != N:
            b_p = jnp.pad(b_p, (0, N_pad - N))
        b2d = b_p.reshape(1, N_pad)
        out = pl.pallas_call(
            _linear_bias_kernel,
            out_shape=out_shape,
            grid_spec=pltpu.PrefetchScalarGridSpec(
                num_scalar_prefetch=0,
                grid=grid,
                in_specs=[
                    x_spec,
                    w_spec,
                    pl.BlockSpec((1, tn), lambda i, j, k: (0, j)),
                ],
                out_specs=o_spec,
                scratch_shapes=scratch,
            ),
            compiler_params=cparams,
            cost_estimate=cost,
        )(x_p, w_t, b2d)
    else:
        out = pl.pallas_call(
            _linear_nobias_kernel,
            out_shape=out_shape,
            grid_spec=pltpu.PrefetchScalarGridSpec(
                num_scalar_prefetch=0,
                grid=grid,
                in_specs=[x_spec, w_spec],
                out_specs=o_spec,
                scratch_shapes=scratch,
            ),
            compiler_params=cparams,
            cost_estimate=cost,
        )(x_p, w_t)

    if (M_pad, N_pad) != (M, N):
        out = out[:M, :N]
    return out


def init_params(key, in_features, out_features, dtype=jnp.float32):
    """Deterministic init mirroring CustomLinear.reset_parameters (kaiming_uniform a=sqrt(5))."""
    kw, kb = jax.random.split(key)
    fan_in = in_features
    gain = math.sqrt(2.0 / (1.0 + 5.0))  # a = sqrt(5)
    w_bound = gain * math.sqrt(3.0 / fan_in)
    weight = jax.random.uniform(
        kw, (out_features, in_features), dtype, minval=-w_bound, maxval=w_bound
    )
    b_bound = 1.0 / math.sqrt(fan_in)
    bias = jax.random.uniform(
        kb, (out_features,), dtype, minval=-b_bound, maxval=b_bound
    )
    return weight, bias


if __name__ == "__main__":
    key = jax.random.PRNGKey(0)
    k_x, k_p, k_x2, k_p2 = jax.random.split(key, 4)

    # Small case matching the module defaults (goes through the fast jnp dispatch).
    batch, in_features, out_features = 8, 32, 32
    x = jax.random.normal(k_x, (batch, in_features), dtype=jnp.float32)
    weight, bias = init_params(k_p, in_features, out_features)
    y_ref = x @ weight.T + bias

    y = custom_linear(x, weight, bias)
    jax.block_until_ready(y)
    assert y.shape == (batch, out_features)
    assert jnp.allclose(y, y_ref, atol=1e-4, rtol=1e-5)

    # Same small case forced through the Pallas kernel (1x1x1 grid).
    y_k = custom_linear(x, weight, bias, min_flops_for_pallas=0)
    jax.block_until_ready(y_k)
    assert jnp.allclose(y_k, y_ref, atol=1e-4, rtol=1e-5)

    # No-bias static specialization, forced through the kernel.
    y_nb = custom_linear(x, weight, None, min_flops_for_pallas=0)
    jax.block_until_ready(y_nb)
    assert jnp.allclose(y_nb, x @ weight.T, atol=1e-4, rtol=1e-5)

    # Non-tile-multiple shapes with small tiles exercise the padded, multi-block
    # grid path including the K ("arbitrary") reduction across several steps.
    M2, K2, N2 = 130, 200, 300
    x2 = jax.random.normal(k_x2, (M2, K2), dtype=jnp.float32)
    w2, b2 = init_params(k_p2, K2, N2)
    y2_ref = x2 @ w2.T + b2

    y2 = custom_linear(x2, w2, b2, tm=64, tn=128, tk=128, min_flops_for_pallas=0)
    jax.block_until_ready(y2)
    assert y2.shape == (M2, N2)
    assert jnp.allclose(y2, y2_ref, atol=2e-4, rtol=2e-5)

    # Optional bf16-MXU path (f32 accumulation) — loose tolerance vs f32 reference.
    y2_bf16 = custom_linear(x2, w2, b2, tm=64, tn=128, tk=128,
                            compute_dtype=jnp.bfloat16, min_flops_for_pallas=0)
    jax.block_until_ready(y2_bf16)
    assert y2_bf16.shape == (M2, N2)
    assert jnp.allclose(y2_bf16, y2_ref, atol=1e-1, rtol=5e-2)

    print("KERNEL_OK")
</pallas_src>

<mosaic_0001>
module attributes {stable_mosaic.version = 11 : i64} {
  func.func @_linear_bias_kernel(%arg0: i32, %arg1: i32, %arg2: i32, %arg3: memref<8x128xf32, #tpu.memory_space<vmem>>, %arg4: memref<128x128xf32, #tpu.memory_space<vmem>>, %arg5: memref<1x128xf32, #tpu.memory_space<vmem>>, %arg6: memref<8x128xf32, #tpu.memory_space<vmem>>, %arg7: memref<8x128xf32, #tpu.memory_space<vmem>>) attributes {dimension_semantics = [#tpu.dimension_semantics<parallel>, #tpu.dimension_semantics<parallel>, #tpu.dimension_semantics<arbitrary>], iteration_bounds = array<i64: 1, 1, 1>, scalar_prefetch = 0 : i64, scratch_operands = 1 : i64, tpu.core_type = #tpu.core_type<tc>, window_params = [{transform_indices = @transform_0, window_bounds = array<i64: 8, 128>}, {transform_indices = @transform_1, window_bounds = array<i64: 128, 128>}, {transform_indices = @transform_2, window_bounds = array<i64: 1, 128>}, {transform_indices = @transform_3, window_bounds = array<i64: 8, 128>}]} {
    %c0_i32 = arith.constant 0 : i32
    %0 = arith.cmpi eq, %arg2, %c0_i32 : i32
    %1 = arith.extui %0 : i1 to i32
    %c0_i32_0 = arith.constant 0 : i32
    %2 = arith.cmpi ne, %1, %c0_i32_0 : i32
    scf.if %2 {
      %c0_10 = arith.constant 0 : index
      %c0_11 = arith.constant 0 : index
      %12 = vector.load %arg5[%c0_10, %c0_11] : memref<1x128xf32, #tpu.memory_space<vmem>>, vector<1x128xf32>
      %13 = vector.shape_cast %12 : vector<1x128xf32> to vector<1x128xf32>
      %14 = vector.broadcast %13 : vector<1x128xf32> to vector<8x128xf32>
      %c0_12 = arith.constant 0 : index
      %c0_13 = arith.constant 0 : index
      %15 = vector.load %arg7[%c0_12, %c0_13] : memref<8x128xf32, #tpu.memory_space<vmem>>, vector<8x128xf32>
      tpu.vector_store %arg7[%c0_12, %c0_13], %14 {strides = array<i32>} : memref<8x128xf32, #tpu.memory_space<vmem>>, vector<8x128xf32>,
    } else {
    }
    %c0 = arith.constant 0 : index
    %c0_1 = arith.constant 0 : index
    %3 = vector.load %arg7[%c0, %c0_1] : memref<8x128xf32, #tpu.memory_space<vmem>>, vector<8x128xf32>
    %c0_2 = arith.constant 0 : index
    %c0_3 = arith.constant 0 : index
    %4 = vector.load %arg3[%c0_2, %c0_3] : memref<8x128xf32, #tpu.memory_space<vmem>>, vector<8x128xf32>
    %c0_4 = arith.constant 0 : index
    %c0_5 = arith.constant 0 : index
    %5 = vector.load %arg4[%c0_4, %c0_5] : memref<128x128xf32, #tpu.memory_space<vmem>>, vector<128x128xf32>
    %cst = arith.constant dense<0.000000e+00> : vector<8x128xf32>
    %6 = tpu.matmul %4, %5, %cst {dimension_numbers = #tpu.dot_dimension_numbers<[1], [0], [0], [1], [0, 0, 1, 1], [], []>} : vector<8x128xf32>, vector<128x128xf32>, vector<8x128xf32> -> vector<8x128xf32>
    %7 = arith.addf %3, %6 : vector<8x128xf32>
    %c0_6 = arith.constant 0 : index
    %c0_7 = arith.constant 0 : index
    %8 = vector.load %arg7[%c0_6, %c0_7] : memref<8x128xf32, #tpu.memory_space<vmem>>, vector<8x128xf32>
    tpu.vector_store %arg7[%c0_6, %c0_7], %7 {strides = array<i32>} : memref<8x128xf32, #tpu.memory_space<vmem>>, vector<8x128xf32>,
    %c0_i32_8 = arith.constant 0 : i32
    %9 = arith.cmpi eq, %arg2, %c0_i32_8 : i32
    %10 = arith.extui %9 : i1 to i32
    %c0_i32_9 = arith.constant 0 : i32
    %11 = arith.cmpi ne, %10, %c0_i32_9 : i32
    scf.if %11 {
      %c0_10 = arith.constant 0 : index
      %c0_11 = arith.constant 0 : index
      %12 = vector.load %arg7[%c0_10, %c0_11] : memref<8x128xf32, #tpu.memory_space<vmem>>, vector<8x128xf32>
      %c0_12 = arith.constant 0 : index
      %c0_13 = arith.constant 0 : index
      %13 = vector.load %arg6[%c0_12, %c0_13] : memref<8x128xf32, #tpu.memory_space<vmem>>, vector<8x128xf32>
      tpu.vector_store %arg6[%c0_12, %c0_13], %12 {strides = array<i32>} : memref<8x128xf32, #tpu.memory_space<vmem>>, vector<8x128xf32>,
    } else {
    }
    return
  }
  func.func @transform_0(%arg0: i32, %arg1: i32, %arg2: i32) -> (i32, i32) {
    %c0_i32 = arith.constant 0 : i32
    return %arg0, %arg2 : i32, i32
  }
  func.func @transform_1(%arg0: i32, %arg1: i32, %arg2: i32) -> (i32, i32) {
    %c0_i32 = arith.constant 0 : i32
    return %arg2, %arg1 : i32, i32
  }
  func.func @transform_2(%arg0: i32, %arg1: i32, %arg2: i32) -> (i32, i32) {
    %c0_i32 = arith.constant 0 : i32
    %c0_i32_0 = arith.constant 0 : i32
    return %c0_i32, %arg1 : i32, i32
  }
  func.func @transform_3(%arg0: i32, %arg1: i32, %arg2: i32) -> (i32, i32) {
    %c0_i32 = arith.constant 0 : i32
    return %arg0, %arg1 : i32, i32
  }
}

</mosaic_0001>

<llo_original>
// kernel: tpu_custom_call.1
$region0: #{tpu_custom_call.1}
  #allocation0 [shape = 'u32[]', space=smem, size = 0x4, offset = 0x4, fixed_abs, tag = 'smem constant byte address 0x4 - core index']
  #allocation1 [shape = 'u32[144,128]{1,0:T(1,128)}', space=vmem, size = 0x12000, scoped, tag = 'internal scratch']
  #allocation2 [shape = 'f32[8,128]{1,0:T(8,128)}', space=vmem, size = 0x1000, scoped, tag = 'scratch operand']
  %s0 = inlined_call_operand.hbm [shape: f32[8,128], index: 0, kind: input, shape index: {}]
  %s1 = inlined_call_operand.hbm [shape: f32[128,128], index: 1, kind: input, shape index: {}]
  %s2 = inlined_call_operand.vmem [shape: f32[1,128], index: 2, kind: input, shape index: {}]
  %s3 = inlined_call_operand.hbm [shape: f32[8,128], index: 3, kind: output, shape index: {}]
  %s4 = sld [smem:[#allocation0]]
  $region38: #{tpu_custom_call.1} parent=0
    _
  %s6 = ssub.s32 1, %s4
  %s7 = scalar_select 0, %s6, %s4
  $region1: #{tpu_custom_call.1} parent=0
    #allocation3 [shape = 'u8[4096]{0}', space=vmem, size = 0x1000, scoped, tag = 'input window, operand 0, single buffered']
    #allocation4 [shape = 's32[1]{0}', space=sflag, size = 0x4, scoped, tag = 'scoped memory for tpu_custom_call.1']
    #allocation5 [shape = 's32[1]{0}', space=sflag, size = 0x4, scoped, tag = 'scoped memory for tpu_custom_call.1']
    #allocation6 [shape = 'u8[65536]{0}', space=vmem, size = 0x10000, scoped, tag = 'input window, operand 1, single buffered']
    #allocation7 [shape = 's32[1]{0}', space=sflag, size = 0x4, scoped, tag = 'scoped memory for tpu_custom_call.1']
    #allocation8 [shape = 'u8[4096]{0}', space=vmem, size = 0x1000, scoped, tag = 'output window, operand 0, single buffered']
    %8 = vsyncpa [#allocation4], 0
    %9 = vsyncpa [#allocation7], 0
    %10 = vsyncpa [#allocation5], 0
    // Predicated region
    $region2: #{tpu_custom_call.1} parent=1 // pred_check
      _
    $region3: #{tpu_custom_call.1} parent=1 // pred_check_branch
      %12 = sbr.rel (0) target = $region5
    $region4: #{tpu_custom_call.1} parent=1 // pred_region
      %s14 = ssub.s32 128, 128
      %15 = vsyncadd [#allocation4], %s14
      %s17 = sshll.u32 [#allocation3], 4
      %s18 = int_to_ptr.vmem [resolvable:$true] %s17
      %20 = dma.hbm_to_vmem [thread:$0]  %s0, 128, %s18, [#allocation4]
    $region5: #{tpu_custom_call.1} parent=1 // pred_fallthru
      _
    // Predicated region
    $region6: #{tpu_custom_call.1} parent=1 // pred_check
      _
    $region7: #{tpu_custom_call.1} parent=1 // pred_check_branch
      %22 = sbr.rel (0) target = $region9
    $region8: #{tpu_custom_call.1} parent=1 // pred_region
      %s24 = ssub.s32 2048, 2048
      %25 = vsyncadd [#allocation7], %s24
      %s26 = sshll.u32 [#allocation6], 4
      %s27 = int_to_ptr.vmem [resolvable:$true] %s26
      %32 = dma.hbm_to_vmem [thread:$0]  %s1, 2048, %s27, [#allocation7], 128, 128, 8
    $region9: #{tpu_custom_call.1} parent=1 // pred_fallthru
      _
    // Predicated region
    $region10: #{tpu_custom_call.1} parent=1 // pred_check
      _
    $region11: #{tpu_custom_call.1} parent=1 // pred_check_branch
      %34 = sbr.rel (0) target = $region13
    $region12: #{tpu_custom_call.1} parent=1 // pred_region
      _
    $region13: #{tpu_custom_call.1} parent=1 // pred_fallthru
      _
    // Predicated region
    $region14: #{tpu_custom_call.1} parent=1 // pred_check
      _
    $region15: #{tpu_custom_call.1} parent=1 // pred_check_branch
      %36 = sbr.rel (0) target = $region17
    $region16: #{tpu_custom_call.1} parent=1 // pred_region
      %37 = dma.done [#allocation4], 128
    $region17: #{tpu_custom_call.1} parent=1 // pred_fallthru
      _
    // Predicated region
    $region18: #{tpu_custom_call.1} parent=1 // pred_check
      _
    $region19: #{tpu_custom_call.1} parent=1 // pred_check_branch
      %39 = sbr.rel (0) target = $region21
    $region20: #{tpu_custom_call.1} parent=1 // pred_region
      %40 = dma.done [#allocation7], 2048
    $region21: #{tpu_custom_call.1} parent=1 // pred_fallthru
      _
    %p41 = scmp.eq.s32.totalorder 0, 0
    // Predicated region
    $region22: #{tpu_custom_call.1} parent=1 // pred_check
      %p42 = pneg %p41
    $region23: #{tpu_custom_call.1} parent=1 // pred_check_branch
      %44 = sbr.rel (%p42) target = $region25
    $region24: #{tpu_custom_call.1} parent=1 // pred_region
      %v45 = vld [vmem:[%s2] sm:$0x1]
      %v47 = vlaneseq
      %v48 = vshrl.u32 %v47, 7
      %v49 = vsub.s32 0, %v48
      %v50 = vrot.slane %v45, %v49
      %52 = vst [vmem:[#allocation2] sm:$0xff] %v50
    $region25: #{tpu_custom_call.1} parent=1 // pred_fallthru
      _
    %v53 = vld [vmem:[#allocation2] sm:$0xff]
    %v54 = vld [vmem:[#allocation3] sm:$0xff]
    %v55 = vld [vmem:[#allocation6] sm:$0xff]
    %v56 = vld [vmem:[#allocation6 + $0x8] sm:$0xff]
    %v57 = vld [vmem:[#allocation6 + $0x10] sm:$0xff]
    %v58 = vld [vmem:[#allocation6 + $0x18] sm:$0xff]
    %v59 = vld [vmem:[#allocation6 + $0x20] sm:$0xff]
    %v60 = vld [vmem:[#allocation6 + $0x28] sm:$0xff]
    %v61 = vld [vmem:[#allocation6 + $0x30] sm:$0xff]
    %v62 = vld [vmem:[#allocation6 + $0x38] sm:$0xff]
    %v63 = vld [vmem:[#allocation6 + $0x40] sm:$0xff]
    %v64 = vld [vmem:[#allocation6 + $0x48] sm:$0xff]
    %v65 = vld [vmem:[#allocation6 + $0x50] sm:$0xff]
    %v66 = vld [vmem:[#allocation6 + $0x58] sm:$0xff]
    %v67 = vld [vmem:[#allocation6 + $0x60] sm:$0xff]
    %v68 = vld [vmem:[#allocation6 + $0x68] sm:$0xff]
    %v69 = vld [vmem:[#allocation6 + $0x70] sm:$0xff]
    %v70 = vld [vmem:[#allocation6 + $0x78] sm:$0xff]
    %71 = vmatprep.subr.mxu0 0.0
    %72 = vmatpush1.msra.mxu0 %v70
    %73 = vmatprep.subr.mxu0 0.0
    %74 = vmatpush1.msra.mxu0 %v69
    %75 = vmatprep.subr.mxu0 0.0
    %76 = vmatpush1.msra.mxu0 %v68
    %77 = vmatprep.subr.mxu0 0.0
    %78 = vmatpush1.msra.mxu0 %v67
    %79 = vmatprep.subr.mxu0 0.0
    %80 = vmatpush1.msra.mxu0 %v66
    %81 = vmatprep.subr.mxu0 0.0
    %82 = vmatpush1.msra.mxu0 %v65
    %83 = vmatprep.subr.mxu0 0.0
    %84 = vmatpush1.msra.mxu0 %v64
    %85 = vmatprep.subr.mxu0 0.0
    %86 = vmatpush1.msra.mxu0 %v63
    %87 = vmatprep.subr.mxu0 0.0
    %88 = vmatpush1.msra.mxu0 %v62
    %89 = vmatprep.subr.mxu0 0.0
    %90 = vmatpush1.msra.mxu0 %v61
    %91 = vmatprep.subr.mxu0 0.0
    %92 = vmatpush1.msra.mxu0 %v60
    %93 = vmatprep.subr.mxu0 0.0
    %94 = vmatpush1.msra.mxu0 %v59
    %95 = vmatprep.subr.mxu0 0.0
    %96 = vmatpush1.msra.mxu0 %v58
    %97 = vmatprep.subr.mxu0 0.0
    %98 = vmatpush1.msra.mxu0 %v57
    %99 = vmatprep.subr.mxu0 0.0
    %100 = vmatpush1.msra.mxu0 %v56
    %101 = vmatprep.subr.mxu0 0.0
    %102 = vmatpush1.msra.mxu0 %v55
    %103 = vmatprep.subr.mxu0 0.0
    %104 = vmatpush2.msra.mxu0 0.0
    %105 = vmatprep.subr.mxu0 0.0
    %106 = vmatpush2.msra.mxu0 0.0
    %107 = vmatprep.subr.mxu0 0.0
    %108 = vmatpush2.msra.mxu0 0.0
    %109 = vmatprep.subr.mxu0 0.0
    %110 = vmatpush2.msra.mxu0 0.0
    %111 = vmatprep.subr.mxu0 0.0
    %112 = vmatpush2.msra.mxu0 0.0
    %113 = vmatprep.subr.mxu0 0.0
    %114 = vmatpush2.msra.mxu0 0.0
    %115 = vmatprep.subr.mxu0 0.0
    %116 = vmatpush2.msra.mxu0 0.0
    %117 = vmatprep.subr.mxu0 0.0
    %118 = vmatpush2.msra.mxu0 0.0
    %119 = vmatprep.subr.mxu0 0.0
    %120 = vmatpush2.msra.mxu0 0.0
    %121 = vmatprep.subr.mxu0 0.0
    %122 = vmatpush2.msra.mxu0 0.0
    %123 = vmatprep.subr.mxu0 0.0
    %124 = vmatpush2.msra.mxu0 0.0
    %125 = vmatprep.subr.mxu0 0.0
    %126 = vmatpush2.msra.mxu0 0.0
    %127 = vmatprep.subr.mxu0 0.0
    %128 = vmatpush2.msra.mxu0 0.0
    %129 = vmatprep.subr.mxu0 0.0
    %130 = vmatpush2.msra.mxu0 0.0
    %131 = vmatprep.subr.mxu0 0.0
    %132 = vmatpush2.msra.mxu0 0.0
    %133 = vmatprep.subr.mxu0 0.0
    %134 = vmatpush2.msra.mxu0 0.0
    %135 = vmatprep.mubr.f32.mxu0 0.0
    %136 = vmatmul.mubr.f32.gmra.mxu0 %v54
    %v137 = vpop.f32.mrf.mxu0
    %v138 = vadd.f32 0.0, %v137
    %v139 = vpop.f32.mrf.mxu0
    %140 = vdwg.mxu0
    %v141 = vadd.f32 %v53, %v138
    %142 = vst [vmem:[#allocation2] sm:$0xff] %v141
    // Predicated region
    $region26: #{tpu_custom_call.1} parent=1 // pred_check
      %p143 = pneg %p41
    $region27: #{tpu_custom_call.1} parent=1 // pred_check_branch
      %145 = sbr.rel (%p143) target = $region29
    $region28: #{tpu_custom_call.1} parent=1 // pred_region
      %v146 = vld [vmem:[#allocation2] sm:$0xff]
      %147 = vst [vmem:[#allocation8] sm:$0xff] %v146
    $region29: #{tpu_custom_call.1} parent=1 // pred_fallthru
      _
    // Predicated region
    $region30: #{tpu_custom_call.1} parent=1 // pred_check
      _
    $region31: #{tpu_custom_call.1} parent=1 // pred_check_branch
      %149 = sbr.rel (0) target = $region33
    $region32: #{tpu_custom_call.1} parent=1 // pred_region
      %s151 = ssub.s32 128, 128
      %152 = vsyncadd [#allocation5], %s151
      %s154 = sshll.u32 [#allocation8], 4
      %s155 = int_to_ptr.vmem [resolvable:$true] %s154
      %157 = dma.vmem_to_hbm [thread:$0]  %s155, 128, %s3, [#allocation5]
    $region33: #{tpu_custom_call.1} parent=1 // pred_fallthru
      _
    // Predicated region
    $region34: #{tpu_custom_call.1} parent=1 // pred_check
      _
    $region35: #{tpu_custom_call.1} parent=1 // pred_check_branch
      %159 = sbr.rel (0) target = $region37
    $region36: #{tpu_custom_call.1} parent=1 // pred_region
      %160 = dma.done [#allocation5], 128
    $region37: #{tpu_custom_call.1} parent=1 // pred_fallthru
      _
    %161 = vsyncpa [#allocation4], 1
    %162 = vsyncpa [#allocation7], 1
    %163 = vsyncpa [#allocation5], 1

</llo_original>
